<compile_context>
chip_gen: v7x
topology: tpu7x:2x2x1
jax: 0.10.0
libtpu: 0.0.40
codegen_flags: <defaults>
</compile_context>

<pallas_src>
import functools
import math

import jax
import jax.numpy as jnp
from jax import lax
from jax.experimental import pallas as pl
from jax.experimental.pallas import tpu as pltpu

_VMEM = functools.partial(pl.BlockSpec, memory_space=pltpu.MemorySpace.VMEM)

BN_EPS = 1e-5
BN_SCALE = 1.0 / math.sqrt(1.0 + BN_EPS)  # eval-mode BatchNorm1d, default stats

# dot_general dimension numbers: contract the LAST dim of both operands (A @ B.T, no transpose)
_DN_LAST = (((1,), (1,)), ((), ()))


def _relu(x):
    return jnp.maximum(x, 0.0)


def _mm(a, b):
    return jnp.dot(a, b, preferred_element_type=jnp.float32)


# ----------------------------------------------------------------------------
# Kernel 1: linear_transform_in (Linear -> Dropout(eval) -> ReLU -> Linear -> ReLU)
#           fused with global_mean_pool (hidden_rep[0]).
# ----------------------------------------------------------------------------
def _in_transform_pool_kernel(x_ref, w1_ref, b1_ref, w2_ref, b2_ref,
                              sel_ref, invcnt_ref, h_ref, g_ref):
    h = _relu(_mm(x_ref[...], w1_ref[...]) + b1_ref[...])
    h = _relu(_mm(h, w2_ref[...]) + b2_ref[...])
    h_ref[...] = h
    g_ref[...] = _mm(sel_ref[...], h) * invcnt_ref[...]


def input_transform_pool(x, w1, b1, w2, b2, sel, inv_cnt):
    n, g, d = x.shape[0], sel.shape[0], w2.shape[1]
    return pl.pallas_call(
        _in_transform_pool_kernel,
        out_shape=(jax.ShapeDtypeStruct((n, d), jnp.float32),
                   jax.ShapeDtypeStruct((g, d), jnp.float32)),
        in_specs=[_VMEM()] * 7,
        out_specs=(_VMEM(), _VMEM()),
    )(x, w1, b1.reshape(1, -1), w2, b2.reshape(1, -1), sel, inv_cnt)


# ----------------------------------------------------------------------------
# Kernel 2: one dense GCN layer, row-tiled: relu(adj @ (h @ W) + b).
#           Tiled over node rows (adj tile [tm, N], out tile [tm, D]), so the
#           [N,N] adjacency never has to fit in VMEM as one block; the row axis
#           is "parallel" (shards across v7x's 2 TensorCores, pipelines DMA).
# ----------------------------------------------------------------------------
def _gcn_layer_kernel(adj_ref, h_ref, w_ref, b_ref, o_ref):
    # h @ W recomputed per row tile (N*Din*Dout FLOPs, small vs the N*N*Dout adj matmul).
    hw = _mm(h_ref[...], w_ref[...]).astype(jnp.bfloat16)
    o_ref[...] = _relu(
        jnp.dot(adj_ref[...], hw, preferred_element_type=jnp.float32) + b_ref[...])


def gcn_layer(adj_bf16, h, w, b, row_tile=None):
    n = adj_bf16.shape[0]
    d_in, d_out = w.shape
    if row_tile is None:
        row_tile = n if n <= 512 else 512
    row_tile = min(row_tile, n)
    grid = (pl.cdiv(n, row_tile),)
    return pl.pallas_call(
        _gcn_layer_kernel,
        out_shape=jax.ShapeDtypeStruct((n, d_out), jnp.float32),
        grid=grid,
        in_specs=[
            pl.BlockSpec((row_tile, n), lambda i: (i, 0)),   # adj row tile (bf16)
            pl.BlockSpec((n, d_in), lambda i: (0, 0)),       # full h, resident across steps
            pl.BlockSpec((d_in, d_out), lambda i: (0, 0)),
            pl.BlockSpec((1, d_out), lambda i: (0, 0)),
        ],
        out_specs=pl.BlockSpec((row_tile, d_out), lambda i: (i, 0)),
        compiler_params=pltpu.CompilerParams(
            dimension_semantics=("parallel",)),
    )(adj_bf16, h, w, b.reshape(1, -1))


# ----------------------------------------------------------------------------
# Kernel 3: global_mean_pool + KerRW (all hidden graphs at once, block-diagonal
#           walk) + Attention, fully fused. All constants (block-diag hidden
#           adjacency, flattened hidden features, group-sum matrix, block-diag
#           attention weights) are precomputed at init.
# ----------------------------------------------------------------------------
def _kerrw_att_pool_kernel(h_ref, sel_ref, invcnt_ref, fh_ref, adjb_ref, gsum_ref,
                           aw1b_ref, ab1b_ref, aw2b_ref,
                           h1_ref, ha_ref, hg_ref, r_sc, *, max_step, hg_count):
    HG = hg_count
    # fused global_mean_pool: h_g = (sel @ h) * (1/count)
    x = _mm(sel_ref[...], h_ref[...]) * invcnt_ref[...]          # [G, D]
    hg_ref[...] = x

    z2 = fh_ref[...]                                             # [HG*S, D]  hidden-graph features
    ab = adjb_ref[...]                                           # [HG*S, HG*S] block-diag hidden adjacency
    gsum = gsum_ref[...]                                         # [HG*S, HG]  per-hidden-graph reduce

    # x @ z2.T without an explicit transpose (contract last dims).
    zx = lax.dot_general(x, z2, _DN_LAST, preferred_element_type=jnp.float32)   # [G, HG*S]

    o = z2
    for step in range(max_step):
        if step > 0:
            o = _mm(ab, o)                                       # one random-walk step, all hidden graphs
        ox = lax.dot_general(x, o, _DN_LAST, preferred_element_type=jnp.float32)
        r = _mm(zx * ox, gsum)                                   # [G, HG] kernel value per hidden graph
        r_sc[:, step * HG:(step + 1) * HG] = r                   # raw rows for attention
        # KerRW output, step-major. Eval-mode BN scale folded into the pred-head weights.
        h1_ref[:, step * HG:(step + 1) * HG] = _relu(r)

    # Attention over steps: one batched projection via block-diagonal weights,
    # softmax over the step axis, weighted sum of raw kernel rows.
    r_all = r_sc[...]                                            # [G, max_step*HG]
    sc = _mm(jnp.tanh(_mm(r_all, aw1b_ref[...]) + ab1b_ref[...]), aw2b_ref[...])   # [G, max_step]
    sc = sc - jnp.max(sc, axis=1, keepdims=True)
    e = jnp.exp(sc)
    wgt = e * pl.reciprocal(jnp.sum(e, axis=1, keepdims=True), approx=True)
    acc = jnp.zeros(ha_ref.shape, jnp.float32)
    for step in range(max_step):
        acc = acc + wgt[:, step:step + 1] * r_sc[:, step * HG:(step + 1) * HG]
    ha_ref[...] = acc


def kerrw_att_pool(h, sel, inv_cnt, feat_flat, adj_block, gsum,
                   aw1_blk, ab1_blk, aw2_blk, max_step, HG, hidden_dim):
    G = sel.shape[0]
    return pl.pallas_call(
        functools.partial(_kerrw_att_pool_kernel, max_step=max_step, hg_count=HG),
        out_shape=(jax.ShapeDtypeStruct((G, max_step * HG), jnp.float32),
                   jax.ShapeDtypeStruct((G, HG), jnp.float32),
                   jax.ShapeDtypeStruct((G, hidden_dim), jnp.float32)),
        in_specs=[_VMEM()] * 9,
        out_specs=(_VMEM(), _VMEM(), _VMEM()),
        scratch_shapes=[pltpu.VMEM((G, max_step * HG), jnp.float32)],
    )(h, sel, inv_cnt, feat_flat, adj_block, gsum, aw1_blk, ab1_blk, aw2_blk)


# ----------------------------------------------------------------------------
# Kernel 4: MI_Est(InBo, h_g, h_a), fully fused: split-W1 joint/margin rows,
#           in-kernel one-hot permutation, in-kernel mean / logsumexp.
# ----------------------------------------------------------------------------
def _mi_inbo_kernel(hg_ref, ha_ref, perm_ref, w1a_ref, w1b_ref, b1_ref,
                    w2_ref, b2_ref, w3_ref, b3_ref, mi_ref, *, n_graphs):
    hg = hg_ref[...]
    ha = ha_ref[...]
    tb = _mm(ha, w1b_ref[...]) + b1_ref[...]        # shared h_a contribution to layer 1

    def head(h):
        h = _relu(_mm(h, w2_ref[...]) + b2_ref[...])
        return _mm(h, w3_ref[...]) + b3_ref[...]    # [G, 1]

    joint = head(_relu(_mm(hg, w1a_ref[...]) + tb))
    hg_perm = _mm(perm_ref[...], hg)                # permutation as one-hot matmul (in VMEM)
    margin = head(_relu(_mm(hg_perm, w1a_ref[...]) + tb))

    # mi = mean(joint) - log(mean(exp(margin)))  via logsumexp
    mmax = jnp.max(margin, axis=0, keepdims=True)                                   # (1,1)
    lse = mmax + jnp.log(jnp.sum(jnp.exp(margin - mmax), axis=0, keepdims=True))    # (1,1)
    mean_j = jnp.sum(joint, axis=0, keepdims=True) * (1.0 / n_graphs)               # (1,1)
    mi_ref[...] = mean_j - (lse - jnp.log(jnp.float32(n_graphs)))


def mi_inbo(params, h_g, h_a, perm_mat, n_graphs):
    return pl.pallas_call(
        functools.partial(_mi_inbo_kernel, n_graphs=n_graphs),
        out_shape=jax.ShapeDtypeStruct((1, 1), jnp.float32),
        in_specs=[_VMEM()] * 10,
        out_specs=_VMEM(),
    )(h_g, h_a, perm_mat,
      params["inbo_w1a"], params["inbo_w1b"], params["inbo_b1"].reshape(1, -1),
      params["inbo_w2"], params["inbo_b2"].reshape(1, -1),
      params["inbo_w3"], params["inbo_b3"].reshape(1, -1))


# ----------------------------------------------------------------------------
# Kernel 5: all linears_prediction heads (Linear -> BN(eval, folded) -> ReLU -> Linear),
#           summed over layers inside one kernel.
# ----------------------------------------------------------------------------
def _pred_sum_kernel(*refs, n_heads):
    o_ref = refs[-1]
    acc = jnp.zeros(o_ref.shape, jnp.float32)
    for i in range(n_heads):
        h_r, w1_r, b1_r, w2_r, b2_r = refs[5 * i:5 * i + 5]
        y = _relu(_mm(h_r[...], w1_r[...]) + b1_r[...])   # BN scales folded into w1/b1 at init
        acc = acc + _mm(y, w2_r[...]) + b2_r[...]
    o_ref[...] = acc


def pred_sum(hidden_rep, pred_params, nclass):
    n_heads = len(hidden_rep)
    g = hidden_rep[0].shape[0]
    args = []
    for hrep, mp in zip(hidden_rep, pred_params):
        args += [hrep, mp["w1"], mp["b1"].reshape(1, -1),
                 mp["w2"], mp["b2"].reshape(1, -1)]
    return pl.pallas_call(
        functools.partial(_pred_sum_kernel, n_heads=n_heads),
        out_shape=jax.ShapeDtypeStruct((g, nclass), jnp.float32),
        in_specs=[_VMEM()] * len(args),
        out_specs=_VMEM(),
    )(*args)


# ----------------------------------------------------------------------------
# Parameter construction (deterministic, synthetic). All hot-path constants
# (block-diag hidden adjacency, flattened hidden features, group-sum matrix,
# block-diag attention weights, BN folds) are built ONCE here.
# ----------------------------------------------------------------------------
def build_adj_hidden_norm(key, HG, S):
    ntri = (S * (S - 1)) // 2
    raw = jax.random.uniform(key, (HG, ntri), jnp.float32, -1.0, 1.0)
    iu = jnp.triu_indices(S, k=1)
    a = jnp.zeros((HG, S, S), jnp.float32)
    a = a.at[:, iu[0], iu[1]].set(jnp.maximum(raw, 0.0))
    return a + jnp.transpose(a, (0, 2, 1))


def _block_diag(a):
    hg, s, _ = a.shape
    eye = jnp.eye(hg, dtype=a.dtype)
    return jnp.einsum('hst,hk->hskt', a, eye).reshape(hg * s, hg * s)


def init_params(key, cfg):
    input_dim, hidden_dim = cfg["input_dim"], cfg["hidden_dim"]
    HG, S = cfg["hidden_graphs"], cfg["size_hidden_graphs"]
    nclass, max_step, L = cfg["nclass"], cfg["max_step"], cfg["num_layers"]
    keys = iter(jax.random.split(key, 128))
    s_bn = BN_SCALE

    def dense(shape):
        lim = 1.0 / math.sqrt(shape[0])
        return jax.random.uniform(next(keys), shape, jnp.float32, -lim, lim)

    p = {}
    p["in_w1"], p["in_b1"] = dense((input_dim, 32)), dense((32,))
    p["in_w2"], p["in_b2"] = dense((32, hidden_dim)), dense((hidden_dim,))
    # graph_convolution is a single shared module across layers in the reference
    p["gcn_w1"], p["gcn_b1"] = dense((hidden_dim, hidden_dim)), dense((hidden_dim,))
    p["gcn_w2"], p["gcn_b2"] = dense((hidden_dim, hidden_dim)), dense((hidden_dim,))

    # Attention(hidden_graphs): Linear(HG,16) -> Tanh -> Linear(16,1,bias=False),
    # shared across layers. Precompute block-diagonal weights so all max_step
    # projections are one matmul pair in-kernel.
    aw1, ab1, aw2 = dense((HG, 16)), dense((16,)), dense((16, 1))
    aw1_blk = jnp.zeros((max_step * HG, max_step * 16), jnp.float32)
    aw2_blk = jnp.zeros((max_step * 16, max_step), jnp.float32)
    for st in range(max_step):
        aw1_blk = aw1_blk.at[st * HG:(st + 1) * HG, st * 16:(st + 1) * 16].set(aw1)
        aw2_blk = aw2_blk.at[st * 16:(st + 1) * 16, st].set(aw2[:, 0])
    p["att_w1_blk"] = aw1_blk
    p["att_b1_blk"] = jnp.tile(ab1, (max_step,)).reshape(1, -1)
    p["att_w2_blk"] = aw2_blk

    # InBo(hidden_dim + HG): 3-layer MLP discriminator; W1 pre-split for the fused MI kernel.
    din = hidden_dim + HG
    w1 = dense((din, 64))
    p["inbo_w1a"], p["inbo_w1b"] = w1[:hidden_dim], w1[hidden_dim:]
    p["inbo_b1"] = dense((64,))
    p["inbo_w2"], p["inbo_b2"] = dense((64, 64)), dense((64,))
    p["inbo_w3"], p["inbo_b3"] = dense((64, 1)), dense((1,))

    # Group-sum matrix collapsing the S walk nodes of each hidden graph (MXU reduce).
    r_i = jnp.arange(HG * S) // S
    p["gsum"] = (r_i[:, None] == jnp.arange(HG)[None, :]).astype(jnp.float32)   # [HG*S, HG]

    # KerRW parameters per layer: block-diag hidden adjacency + flattened hidden features.
    p["ker"] = []
    for _ in range(L):
        adj_h = build_adj_hidden_norm(next(keys), HG, S)
        feat_h = jax.random.uniform(next(keys), (HG, S, hidden_dim), jnp.float32, 0.0, 1.0)
        p["ker"].append({
            "adj_block": _block_diag(adj_h),                     # [HG*S, HG*S]
            "feat_flat": feat_h.reshape(HG * S, hidden_dim),     # [HG*S, D]
        })

    # linears_prediction: MLP(2, in, hidden_dim, nclass) per hidden_rep entry.
    # Eval-mode BN folds: the head MLP's internal BN -> (w1*s, b1*s); heads that
    # consume KerRW outputs also absorb the KerRW-output BN scale (the kernel
    # emits relu(r) instead of relu(r*s) = s*relu(r)) -> extra factor s on w1.
    p["pred"] = []
    for layer in range(L + 1):
        din_l = hidden_dim if layer == 0 else HG * max_step
        w1p, b1p = dense((din_l, hidden_dim)), dense((hidden_dim,))
        w2p, b2p = dense((hidden_dim, nclass)), dense((nclass,))
        in_fold = s_bn if layer == 0 else s_bn * s_bn
        p["pred"].append({"w1": w1p * in_fold, "b1": b1p * s_bn, "w2": w2p, "b2": b2p})
    return p


# ----------------------------------------------------------------------------
# KGIB forward
# ----------------------------------------------------------------------------
def kgib_forward(params, adj, features, graph_indicator, n_graphs, cfg, gcn_row_tile=None):
    num_layers = cfg["num_layers"]
    max_step, HG = cfg["max_step"], cfg["hidden_graphs"]
    hidden_dim = cfg["hidden_dim"]

    # selection matrix and reciprocal counts for global_mean_pool (fused in-kernel)
    sel = (jnp.arange(n_graphs)[:, None] == graph_indicator[None, :]).astype(jnp.float32)
    inv_cnt = 1.0 / jnp.maximum(jnp.sum(sel, axis=1, keepdims=True), 1.0)

    # bf16 adjacency: halves the dominant HBM stream; f32 accumulation in the MXU.
    adj_bf16 = adj.astype(jnp.bfloat16)

    h, graph_embs = input_transform_pool(
        features, params["in_w1"], params["in_b1"],
        params["in_w2"], params["in_b2"], sel, inv_cnt)
    hidden_rep = [graph_embs]
    loss_mi = jnp.float32(0.0)

    for layer in range(num_layers):
        # Two row-tiled GCN layer calls (layer 2 needs ALL nodes' layer-1 output).
        h = gcn_layer(adj_bf16, h, params["gcn_w1"], params["gcn_b1"], gcn_row_tile)
        h = gcn_layer(adj_bf16, h, params["gcn_w2"], params["gcn_b2"], gcn_row_tile)

        kp = params["ker"][layer]
        h1, h_a, h_g = kerrw_att_pool(
            h, sel, inv_cnt, kp["feat_flat"], kp["adj_block"], params["gsum"],
            params["att_w1_blk"], params["att_b1_blk"], params["att_w2_blk"],
            max_step, HG, hidden_dim)

        # MI_Est(InBo, h_g, h_a): fused joint/margin MLP + mean/logsumexp.
        # TODO(synk): torch.randperm has no deterministic Pallas equivalent; fixed-key perm used.
        perm = jax.random.permutation(jax.random.PRNGKey(1000 + layer), n_graphs)
        perm_mat = jnp.eye(n_graphs, dtype=jnp.float32)[perm]
        mi = mi_inbo(params, h_g, h_a, perm_mat, n_graphs)
        loss_mi = loss_mi + mi[0, 0]

        hidden_rep.append(h1)

    score = pred_sum(hidden_rep, params["pred"], cfg["nclass"])
    return score, loss_mi


# ----------------------------------------------------------------------------
# main
# ----------------------------------------------------------------------------
if __name__ == "__main__":
    cfg = dict(input_dim=8, hidden_dim=32, hidden_graphs=8, size_hidden_graphs=4,
               nclass=2, max_step=3, num_layers=2)

    key = jax.random.PRNGKey(0)
    k_feat, k_param = jax.random.split(key)

    n_graphs, nodes_per = 6, 8
    n_nodes = n_graphs * nodes_per                      # 48 nodes
    graph_indicator = jnp.repeat(jnp.arange(n_graphs, dtype=jnp.int32), nodes_per)
    # dense block-diagonal, row-normalized adjacency (with self loops)
    blocks = (graph_indicator[:, None] == graph_indicator[None, :]).astype(jnp.float32)
    adj = blocks / jnp.sum(blocks, axis=1, keepdims=True)
    features = jax.random.normal(k_feat, (n_nodes, cfg["input_dim"]), jnp.float32)

    params = init_params(k_param, cfg)

    # row_tile=16 exercises the row-tiled GCN grid (3 steps) even at this small size.
    score, loss_mi = kgib_forward(params, adj, features, graph_indicator,
                                  n_graphs, cfg, gcn_row_tile=16)
    score = jax.block_until_ready(score)
    loss_mi = jax.block_until_ready(loss_mi)

    assert score.shape == (n_graphs, cfg["nclass"])
    assert loss_mi.shape == ()
    assert bool(jnp.all(jnp.isfinite(score))) and bool(jnp.isfinite(loss_mi))
    print("KERNEL_OK")
</pallas_src>

<mosaic_0001>
module attributes {stable_mosaic.version = 11 : i64} {
  func.func @_in_transform_pool_kernel(%arg0: memref<48x8xf32, #tpu.memory_space<vmem>>, %arg1: memref<8x32xf32, #tpu.memory_space<vmem>>, %arg2: memref<1x32xf32, #tpu.memory_space<vmem>>, %arg3: memref<32x32xf32, #tpu.memory_space<vmem>>, %arg4: memref<1x32xf32, #tpu.memory_space<vmem>>, %arg5: memref<6x48xf32, #tpu.memory_space<vmem>>, %arg6: memref<6x1xf32, #tpu.memory_space<vmem>>, %arg7: memref<48x32xf32, #tpu.memory_space<vmem>>, %arg8: memref<6x32xf32, #tpu.memory_space<vmem>>) attributes {dimension_semantics = [], scalar_prefetch = 0 : i64, scratch_operands = 0 : i64, tpu.core_type = #tpu.core_type<tc>} {
    %c0 = arith.constant 0 : index
    %c0_0 = arith.constant 0 : index
    %0 = vector.load %arg0[%c0, %c0_0] : memref<48x8xf32, #tpu.memory_space<vmem>>, vector<48x8xf32>
    %c0_1 = arith.constant 0 : index
    %c0_2 = arith.constant 0 : index
    %1 = vector.load %arg1[%c0_1, %c0_2] : memref<8x32xf32, #tpu.memory_space<vmem>>, vector<8x32xf32>
    %cst = arith.constant dense<0.000000e+00> : vector<48x32xf32>
    %2 = tpu.matmul %0, %1, %cst {dimension_numbers = #tpu.dot_dimension_numbers<[1], [0], [0], [1], [0, 0, 1, 1], [], []>} : vector<48x8xf32>, vector<8x32xf32>, vector<48x32xf32> -> vector<48x32xf32>
    %c0_3 = arith.constant 0 : index
    %c0_4 = arith.constant 0 : index
    %3 = vector.load %arg2[%c0_3, %c0_4] : memref<1x32xf32, #tpu.memory_space<vmem>>, vector<1x32xf32>
    %4 = vector.broadcast %3 : vector<1x32xf32> to vector<48x32xf32>
    %5 = arith.addf %2, %4 : vector<48x32xf32>
    %cst_5 = arith.constant 0.000000e+00 : f32
    %6 = vector.broadcast %cst_5 : f32 to vector<48x32xf32>
    %7 = arith.maximumf %5, %6 : vector<48x32xf32>
    %c0_6 = arith.constant 0 : index
    %c0_7 = arith.constant 0 : index
    %8 = vector.load %arg3[%c0_6, %c0_7] : memref<32x32xf32, #tpu.memory_space<vmem>>, vector<32x32xf32>
    %cst_8 = arith.constant dense<0.000000e+00> : vector<48x32xf32>
    %9 = tpu.matmul %7, %8, %cst_8 {dimension_numbers = #tpu.dot_dimension_numbers<[1], [0], [0], [1], [0, 0, 1, 1], [], []>} : vector<48x32xf32>, vector<32x32xf32>, vector<48x32xf32> -> vector<48x32xf32>
    %c0_9 = arith.constant 0 : index
    %c0_10 = arith.constant 0 : index
    %10 = vector.load %arg4[%c0_9, %c0_10] : memref<1x32xf32, #tpu.memory_space<vmem>>, vector<1x32xf32>
    %11 = vector.broadcast %10 : vector<1x32xf32> to vector<48x32xf32>
    %12 = arith.addf %9, %11 : vector<48x32xf32>
    %cst_11 = arith.constant 0.000000e+00 : f32
    %13 = vector.broadcast %cst_11 : f32 to vector<48x32xf32>
    %14 = arith.maximumf %12, %13 : vector<48x32xf32>
    %c0_12 = arith.constant 0 : index
    %c0_13 = arith.constant 0 : index
    %15 = vector.load %arg7[%c0_12, %c0_13] : memref<48x32xf32, #tpu.memory_space<vmem>>, vector<48x32xf32>
    tpu.vector_store %arg7[%c0_12, %c0_13], %14 {strides = array<i32>} : memref<48x32xf32, #tpu.memory_space<vmem>>, vector<48x32xf32>,
    %c0_14 = arith.constant 0 : index
    %c0_15 = arith.constant 0 : index
    %16 = vector.load %arg5[%c0_14, %c0_15] : memref<6x48xf32, #tpu.memory_space<vmem>>, vector<6x48xf32>
    %cst_16 = arith.constant dense<0.000000e+00> : vector<6x32xf32>
    %17 = tpu.matmul %16, %14, %cst_16 {dimension_numbers = #tpu.dot_dimension_numbers<[1], [0], [0], [1], [0, 0, 1, 1], [], []>} : vector<6x48xf32>, vector<48x32xf32>, vector<6x32xf32> -> vector<6x32xf32>
    %c0_17 = arith.constant 0 : index
    %c0_18 = arith.constant 0 : index
    %18 = vector.load %arg6[%c0_17, %c0_18] : memref<6x1xf32, #tpu.memory_space<vmem>>, vector<6x1xf32>
    %19 = vector.broadcast %18 : vector<6x1xf32> to vector<6x32xf32>
    %20 = arith.mulf %17, %19 : vector<6x32xf32>
    %c0_19 = arith.constant 0 : index
    %c0_20 = arith.constant 0 : index
    %21 = vector.load %arg8[%c0_19, %c0_20] : memref<6x32xf32, #tpu.memory_space<vmem>>, vector<6x32xf32>
    tpu.vector_store %arg8[%c0_19, %c0_20], %20 {strides = array<i32>} : memref<6x32xf32, #tpu.memory_space<vmem>>, vector<6x32xf32>,
    return
  }
}

</mosaic_0001>

<llo_original>
// kernel: tpu_custom_call.1
$region0: #{tpu_custom_call.1}
  #allocation0 [shape = 'u32[]', space=smem, size = 0x4, offset = 0x4, fixed_abs, tag = 'smem constant byte address 0x4 - core index']
  #allocation1 [shape = 'u32[144,128]{1,0:T(1,128)}', space=vmem, size = 0x12000, scoped, tag = 'internal scratch']
  %s0 = inlined_call_operand.vmem [shape: f32[48,8], index: 0, kind: input, shape index: {}]
  %s1 = inlined_call_operand.vmem [shape: f32[8,32], index: 1, kind: input, shape index: {}]
  %s2 = inlined_call_operand.vmem [shape: f32[1,32], index: 2, kind: input, shape index: {}]
  %s3 = inlined_call_operand.vmem [shape: f32[32,32], index: 3, kind: input, shape index: {}]
  %s4 = inlined_call_operand.vmem [shape: f32[1,32], index: 4, kind: input, shape index: {}]
  %s5 = inlined_call_operand.vmem [shape: f32[6,48], index: 5, kind: input, shape index: {}]
  %s6 = inlined_call_operand.vmem [shape: f32[6,1], index: 6, kind: input, shape index: {}]
  %s7 = inlined_call_operand.vmem [shape: f32[48,32], index: 7, kind: output, shape index: {0}]
  %s8 = inlined_call_operand.hbm [shape: f32[6,32], index: 8, kind: output, shape index: {1}]
  %9 = xla_tuple %s7, %s8
  %s10 = sld [smem:[#allocation0]]
  $region46: #{tpu_custom_call.1} parent=0
    _
  %s12 = ssub.s32 1, %s10
  %s13 = scalar_select 0, %s12, %s10
  $region1: #{tpu_custom_call.1} parent=0
    #allocation2 [shape = 'u8[4096]{0}', space=vmem, size = 0x1000, scoped, tag = 'output window, operand 1, single buffered']
    #allocation3 [shape = 's32[1]{0}', space=sflag, size = 0x4, scoped, tag = 'scoped memory for tpu_custom_call.1']
    %14 = vsyncpa [#allocation3], 0
    // Predicated region
    $region2: #{tpu_custom_call.1} parent=1 // pred_check
      _
    $region3: #{tpu_custom_call.1} parent=1 // pred_check_branch
      %16 = sbr.rel (0) target = $region5
    $region4: #{tpu_custom_call.1} parent=1 // pred_region
      _
    $region5: #{tpu_custom_call.1} parent=1 // pred_fallthru
      _
    // Predicated region
    $region6: #{tpu_custom_call.1} parent=1 // pred_check
      _
    $region7: #{tpu_custom_call.1} parent=1 // pred_check_branch
      %18 = sbr.rel (0) target = $region9
    $region8: #{tpu_custom_call.1} parent=1 // pred_region
      _
    $region9: #{tpu_custom_call.1} parent=1 // pred_fallthru
      _
    // Predicated region
    $region10: #{tpu_custom_call.1} parent=1 // pred_check
      _
    $region11: #{tpu_custom_call.1} parent=1 // pred_check_branch
      %20 = sbr.rel (0) target = $region13
    $region12: #{tpu_custom_call.1} parent=1 // pred_region
      _
    $region13: #{tpu_custom_call.1} parent=1 // pred_fallthru
      _
    // Predicated region
    $region14: #{tpu_custom_call.1} parent=1 // pred_check
      _
    $region15: #{tpu_custom_call.1} parent=1 // pred_check_branch
      %22 = sbr.rel (0) target = $region17
    $region16: #{tpu_custom_call.1} parent=1 // pred_region
      _
    $region17: #{tpu_custom_call.1} parent=1 // pred_fallthru
      _
    // Predicated region
    $region18: #{tpu_custom_call.1} parent=1 // pred_check
      _
    $region19: #{tpu_custom_call.1} parent=1 // pred_check_branch
      %24 = sbr.rel (0) target = $region21
    $region20: #{tpu_custom_call.1} parent=1 // pred_region
      _
    $region21: #{tpu_custom_call.1} parent=1 // pred_fallthru
      _
    // Predicated region
    $region22: #{tpu_custom_call.1} parent=1 // pred_check
      _
    $region23: #{tpu_custom_call.1} parent=1 // pred_check_branch
      %26 = sbr.rel (0) target = $region25
    $region24: #{tpu_custom_call.1} parent=1 // pred_region
      _
    $region25: #{tpu_custom_call.1} parent=1 // pred_fallthru
      _
    // Predicated region
    $region26: #{tpu_custom_call.1} parent=1 // pred_check
      _
    $region27: #{tpu_custom_call.1} parent=1 // pred_check_branch
      %28 = sbr.rel (0) target = $region29
    $region28: #{tpu_custom_call.1} parent=1 // pred_region
      _
    $region29: #{tpu_custom_call.1} parent=1 // pred_fallthru
      _
    %v29 = vld [vmem:[%s0] sm:$0xff]
    %v30 = vld [vmem:[%s0 + $0x8] sm:$0xff]
    %v31 = vld [vmem:[%s0 + $0x10] sm:$0xff]
    %v32 = vld [vmem:[%s0 + $0x18] sm:$0xff]
    %v33 = vld [vmem:[%s0 + $0x20] sm:$0xff]
    %v34 = vld [vmem:[%s0 + $0x28] sm:$0xff]
    %v35 = vld [vmem:[%s1] sm:$0xff]
    %v36 = vld [vmem:[%s2] sm:$0x1]
    %v38 = vlaneseq
    %v39 = vshrl.u32 %v38, 7
    %v40 = vsub.s32 0, %v39
    %v41 = vrot.slane %v36, %v40
    %vm43 = vcmask 64512
    %v45 = vsel %vm43, %v29, 0
    %v48 = vsel %vm43, %v30, 0
    %v51 = vsel %vm43, %v31, 0
    %v54 = vsel %vm43, %v32, 0
    %v57 = vsel %vm43, %v33, 0
    %v60 = vsel %vm43, %v34, 0
    %62 = vmatprep.subr.mxu0 0.0
    %63 = vmatpush1.msra.mxu0 %v35
    %64 = vmatprep.subr.mxu0 0.0
    %65 = vmatpush1.msra.mxu0 0.0
    %66 = vmatprep.subr.mxu0 0.0
    %67 = vmatpush1.msra.mxu0 0.0
    %68 = vmatprep.subr.mxu0 0.0
    %69 = vmatpush1.msra.mxu0 0.0
    %70 = vmatprep.subr.mxu0 0.0
    %71 = vmatpush1.msra.mxu0 0.0
    %72 = vmatprep.subr.mxu0 0.0
    %73 = vmatpush1.msra.mxu0 0.0
    %74 = vmatprep.subr.mxu0 0.0
    %75 = vmatpush1.msra.mxu0 0.0
    %76 = vmatprep.subr.mxu0 0.0
    %77 = vmatpush1.msra.mxu0 0.0
    %78 = vmatprep.subr.mxu0 0.0
    %79 = vmatpush1.msra.mxu0 0.0
    %80 = vmatprep.subr.mxu0 0.0
    %81 = vmatpush1.msra.mxu0 0.0
    %82 = vmatprep.subr.mxu0 0.0
    %83 = vmatpush1.msra.mxu0 0.0
    %84 = vmatprep.subr.mxu0 0.0
    %85 = vmatpush1.msra.mxu0 0.0
    %86 = vmatprep.subr.mxu0 0.0
    %87 = vmatpush1.msra.mxu0 0.0
    %88 = vmatprep.subr.mxu0 0.0
    %89 = vmatpush1.msra.mxu0 0.0
    %90 = vmatprep.subr.mxu0 0.0
    %91 = vmatpush1.msra.mxu0 0.0
    %92 = vmatprep.subr.mxu0 0.0
    %93 = vmatpush1.msra.mxu0 0.0
    %94 = vmatprep.subr.mxu0 0.0
    %95 = vmatpush1.msra.mxu0 0.0
    %96 = vmatprep.subr.mxu0 0.0
    %97 = vmatpush1.msra.mxu0 0.0
    %98 = vmatprep.subr.mxu0 0.0
    %99 = vmatpush1.msra.mxu0 0.0
    %100 = vmatprep.subr.mxu0 0.0
    %101 = vmatpush1.msra.mxu0 0.0
    %102 = vmatprep.subr.mxu0 0.0
    %103 = vmatpush1.msra.mxu0 0.0
    %104 = vmatprep.subr.mxu0 0.0
    %105 = vmatpush1.msra.mxu0 0.0
    %106 = vmatprep.subr.mxu0 0.0
    %107 = vmatpush1.msra.mxu0 0.0
    %108 = vmatprep.subr.mxu0 0.0
    %109 = vmatpush1.msra.mxu0 0.0
    %110 = vmatprep.subr.mxu0 0.0
    %111 = vmatpush1.msra.mxu0 0.0
    %112 = vmatprep.subr.mxu0 0.0
    %113 = vmatpush1.msra.mxu0 0.0
    %114 = vmatprep.subr.mxu0 0.0
    %115 = vmatpush1.msra.mxu0 0.0
    %116 = vmatprep.subr.mxu0 0.0
    %117 = vmatpush1.msra.mxu0 0.0
    %118 = vmatprep.subr.mxu0 0.0
    %119 = vmatpush1.msra.mxu0 0.0
    %120 = vmatprep.subr.mxu0 0.0
    %121 = vmatpush1.msra.mxu0 0.0
    %122 = vmatprep.subr.mxu0 0.0
    %123 = vmatpush1.msra.mxu0 0.0
    %124 = vmatprep.subr.mxu0 0.0
    %125 = vmatpush1.msra.mxu0 0.0
    %126 = vmatprep.mubr.f32.mxu0 0.0
    %127 = vmatmul.mubr.f32.gmra.mrb[0].mxu0 %v45
    %v128 = vpop.f32.mrb[0].mxu0
    %v129 = vadd.f32 %v41, %v128
    %v130 = vpop.f32.mrb[0].mxu0
    %131 = vmatprep.mubr.f32.mxu0 0.0
    %132 = vmatmul.mubr.f32.gmra.mrb[0].mxu0 %v48
    %v133 = vpop.f32.mrb[0].mxu0
    %v134 = vadd.f32 %v41, %v133
    %v135 = vpop.f32.mrb[0].mxu0
    %136 = vmatprep.mubr.f32.mxu0 0.0
    %137 = vmatmul.mubr.f32.gmra.mrb[0].mxu0 %v51
    %v138 = vpop.f32.mrb[0].mxu0
    %v139 = vadd.f32 %v41, %v138
    %v140 = vpop.f32.mrb[0].mxu0
    %141 = vmatprep.mubr.f32.mxu0 0.0
    %142 = vmatmul.mubr.f32.gmra.mrb[0].mxu0 %v54
    %v143 = vpop.f32.mrb[0].mxu0
    %v144 = vadd.f32 %v41, %v143
    %v145 = vpop.f32.mrb[0].mxu0
    %146 = vmatprep.mubr.f32.mxu0 0.0
    %147 = vmatmul.mubr.f32.gmra.mrb[0].mxu0 %v57
    %v148 = vpop.f32.mrb[0].mxu0
    %v149 = vadd.f32 %v41, %v148
    %v150 = vpop.f32.mrb[0].mxu0
    %151 = vmatprep.mubr.f32.mxu0 0.0
    %152 = vmatmul.mubr.f32.gmra.mrb[0].mxu0 %v60
    %v153 = vpop.f32.mrb[0].mxu0
    %v154 = vadd.f32 %v41, %v153
    %v155 = vpop.f32.mrb[0].mxu0
    %156 = vdwg.mxu0
    %v157 = vmax.f32 %v129, 0.0
    %v158 = vmax.f32 %v134, 0.0
    %v159 = vmax.f32 %v139, 0.0
    %v160 = vmax.f32 %v144, 0.0
    %v161 = vmax.f32 %v149, 0.0
    %v162 = vmax.f32 %v154, 0.0
    %v163 = vld [vmem:[%s3] sm:$0xff]
    %v164 = vld [vmem:[%s3 + $0x8] sm:$0xff]
    %v165 = vld [vmem:[%s3 + $0x10] sm:$0xff]
    %v166 = vld [vmem:[%s3 + $0x18] sm:$0xff]
    %v167 = vld [vmem:[%s4] sm:$0x1]
    %v169 = vlaneseq
    %v170 = vshrl.u32 %v169, 7
    %v171 = vsub.s32 0, %v170
    %v172 = vrot.slane %v167, %v171
    %vm174 = vcmask 261120
    %v176 = vsel %vm174, %v157, 0
    %v179 = vsel %vm174, %v158, 0
    %v182 = vsel %vm174, %v159, 0
    %v185 = vsel %vm174, %v160, 0
    %v188 = vsel %vm174, %v161, 0
    %v191 = vsel %vm174, %v162, 0
    %193 = vmatprep.subr.mxu0 0.0
    %194 = vmatpush1.msra.mxu0 %v163
    %195 = vmatprep.subr.mxu0 0.0
    %196 = vmatpush1.msra.mxu0 %v164
    %197 = vmatprep.subr.mxu0 0.0
    %198 = vmatpush1.msra.mxu0 %v165
    %199 = vmatprep.subr.mxu0 0.0
    %200 = vmatpush1.msra.mxu0 %v166
    %201 = vmatprep.subr.mxu0 0.0
    %202 = vmatpush1.msra.mxu0 0.0
    %203 = vmatprep.subr.mxu0 0.0
    %204 = vmatpush1.msra.mxu0 0.0
    %205 = vmatprep.subr.mxu0 0.0
    %206 = vmatpush1.msra.mxu0 0.0
    %207 = vmatprep.subr.mxu0 0.0
    %208 = vmatpush1.msra.mxu0 0.0
    %209 = vmatprep.subr.mxu0 0.0
    %210 = vmatpush1.msra.mxu0 0.0
    %211 = vmatprep.subr.mxu0 0.0
    %212 = vmatpush1.msra.mxu0 0.0
    %213 = vmatprep.subr.mxu0 0.0
    %214 = vmatpush1.msra.mxu0 0.0
    %215 = vmatprep.subr.mxu0 0.0
    %216 = vmatpush1.msra.mxu0 0.0
    %217 = vmatprep.subr.mxu0 0.0
    %218 = vmatpush1.msra.mxu0 0.0
    %219 = vmatprep.subr.mxu0 0.0
    %220 = vmatpush1.msra.mxu0 0.0
    %221 = vmatprep.subr.mxu0 0.0
    %222 = vmatpush1.msra.mxu0 0.0
    %223 = vmatprep.subr.mxu0 0.0
    %224 = vmatpush1.msra.mxu0 0.0
    %225 = vmatprep.subr.mxu0 0.0
    %226 = vmatpush1.msra.mxu0 0.0
    %227 = vmatprep.subr.mxu0 0.0
    %228 = vmatpush1.msra.mxu0 0.0
    %229 = vmatprep.subr.mxu0 0.0
    %230 = vmatpush1.msra.mxu0 0.0
    %231 = vmatprep.subr.mxu0 0.0
    %232 = vmatpush1.msra.mxu0 0.0
    %233 = vmatprep.subr.mxu0 0.0
    %234 = vmatpush1.msra.mxu0 0.0
    %235 = vmatprep.subr.mxu0 0.0
    %236 = vmatpush1.msra.mxu0 0.0
    %237 = vmatprep.subr.mxu0 0.0
    %238 = vmatpush1.msra.mxu0 0.0
    %239 = vmatprep.subr.mxu0 0.0
    %240 = vmatpush1.msra.mxu0 0.0
    %241 = vmatprep.subr.mxu0 0.0
    %242 = vmatpush1.msra.mxu0 0.0
    %243 = vmatprep.subr.mxu0 0.0
    %244 = vmatpush1.msra.mxu0 0.0
    %245 = vmatprep.subr.mxu0 0.0
    %246 = vmatpush1.msra.mxu0 0.0
    %247 = vmatprep.subr.mxu0 0.0
    %248 = vmatpush1.msra.mxu0 0.0
    %249 = vmatprep.subr.mxu0 0.0
    %250 = vmatpush1.msra.mxu0 0.0
    %251 = vmatprep.subr.mxu0 0.0
    %252 = vmatpush1.msra.mxu0 0.0
    %253 = vmatprep.subr.mxu0 0.0
    %254 = vmatpush1.msra.mxu0 0.0
    %255 = vmatprep.subr.mxu0 0.0
    %256 = vmatpush1.msra.mxu0 0.0
    %257 = vmatprep.mubr.f32.mxu0 0.0
    %258 = vmatmul.mubr.f32.gmra.mrb[0].mxu0 %v176
    %v259 = vpop.f32.mrb[0].mxu0
    %v260 = vadd.f32 %v172, %v259
    %v261 = vpop.f32.mrb[0].mxu0
    %262 = vmatprep.mubr.f32.mxu0 0.0
    %263 = vmatmul.mubr.f32.gmra.mrb[0].mxu0 %v179
    %v264 = vpop.f32.mrb[0].mxu0
    %v265 = vadd.f32 %v172, %v264
    %v266 = vpop.f32.mrb[0].mxu0
    %267 = vmatprep.mubr.f32.mxu0 0.0
    %268 = vmatmul.mubr.f32.gmra.mrb[0].mxu0 %v182
    %v269 = vpop.f32.mrb[0].mxu0
    %v270 = vadd.f32 %v172, %v269
    %v271 = vpop.f32.mrb[0].mxu0
    %272 = vmatprep.mubr.f32.mxu0 0.0
    %273 = vmatmul.mubr.f32.gmra.mrb[0].mxu0 %v185
    %v274 = vpop.f32.mrb[0].mxu0
    %v275 = vadd.f32 %v172, %v274
    %v276 = vpop.f32.mrb[0].mxu0
    %277 = vmatprep.mubr.f32.mxu0 0.0
    %278 = vmatmul.mubr.f32.gmra.mrb[0].mxu0 %v188
    %v279 = vpop.f32.mrb[0].mxu0
    %v280 = vadd.f32 %v172, %v279
    %v281 = vpop.f32.mrb[0].mxu0
    %282 = vmatprep.mubr.f32.mxu0 0.0
    %283 = vmatmul.mubr.f32.gmra.mrb[0].mxu0 %v191
    %v284 = vpop.f32.mrb[0].mxu0
    %v285 = vadd.f32 %v172, %v284
    %v286 = vpop.f32.mrb[0].mxu0
    %287 = vdwg.mxu0
    %v288 = vmax.f32 %v260, 0.0
    %v289 = vmax.f32 %v265, 0.0
    %v290 = vmax.f32 %v270, 0.0
    %v291 = vmax.f32 %v275, 0.0
    %v292 = vmax.f32 %v280, 0.0
    %v293 = vmax.f32 %v285, 0.0
    %294 = vst.msk [vmem:[%s7] sm:$0xff] %vm174, %v288
    %295 = vst.msk [vmem:[%s7 + $0x8] sm:$0xff] %vm174, %v289
    %296 = vst.msk [vmem:[%s7 + $0x10] sm:$0xff] %vm174, %v290
    %297 = vst.msk [vmem:[%s7 + $0x18] sm:$0xff] %vm174, %v291
    %298 = vst.msk [vmem:[%s7 + $0x20] sm:$0xff] %vm174, %v292
    %299 = vst.msk [vmem:[%s7 + $0x28] sm:$0xff] %vm174, %v293
    %v300 = vld [vmem:[%s5] sm:$0x3f]
    %vm301 = vcmask 392192
    %v303 = vsel %vm301, %v300, 0
    %305 = vmatprep.subr.mxu0 0.0
    %306 = vmatpush1.msra.mxu0 %v288
    %307 = vmatprep.subr.mxu0 0.0
    %308 = vmatpush1.msra.mxu0 %v289
    %309 = vmatprep.subr.mxu0 0.0
    %310 = vmatpush1.msra.mxu0 %v290
    %311 = vmatprep.subr.mxu0 0.0
    %312 = vmatpush1.msra.mxu0 %v291
    %313 = vmatprep.subr.mxu0 0.0
    %314 = vmatpush1.msra.mxu0 %v292
    %315 = vmatprep.subr.mxu0 0.0
    %316 = vmatpush1.msra.mxu0 %v293
    %317 = vmatprep.subr.mxu0 0.0
    %318 = vmatpush1.msra.mxu0 0.0
    %319 = vmatprep.subr.mxu0 0.0
    %320 = vmatpush1.msra.mxu0 0.0
    %321 = vmatprep.subr.mxu0 0.0
    %322 = vmatpush1.msra.mxu0 0.0
    %323 = vmatprep.subr.mxu0 0.0
    %324 = vmatpush1.msra.mxu0 0.0
    %325 = vmatprep.subr.mxu0 0.0
    %326 = vmatpush1.msra.mxu0 0.0
    %327 = vmatprep.subr.mxu0 0.0
    %328 = vmatpush1.msra.mxu0 0.0
    %329 = vmatprep.subr.mxu0 0.0
    %330 = vmatpush1.msra.mxu0 0.0
    %331 = vmatprep.subr.mxu0 0.0
    %332 = vmatpush1.msra.mxu0 0.0
    %333 = vmatprep.subr.mxu0 0.0
    %334 = vmatpush1.msra.mxu0 0.0
    %335 = vmatprep.subr.mxu0 0.0
    %336 = vmatpush1.msra.mxu0 0.0
    %337 = vmatprep.subr.mxu0 0.0
    %338 = vmatpush1.msra.mxu0 0.0
    %339 = vmatprep.subr.mxu0 0.0
    %340 = vmatpush1.msra.mxu0 0.0
    %341 = vmatprep.subr.mxu0 0.0
    %342 = vmatpush1.msra.mxu0 0.0
    %343 = vmatprep.subr.mxu0 0.0
    %344 = vmatpush1.msra.mxu0 0.0
    %345 = vmatprep.subr.mxu0 0.0
    %346 = vmatpush1.msra.mxu0 0.0
    %347 = vmatprep.subr.mxu0 0.0
    %348 = vmatpush1.msra.mxu0 0.0
    %349 = vmatprep.subr.mxu0 0.0
    %350 = vmatpush1.msra.mxu0 0.0
    %351 = vmatprep.subr.mxu0 0.0
    %352 = vmatpush1.msra.mxu0 0.0
    %353 = vmatprep.subr.mxu0 0.0
    %354 = vmatpush1.msra.mxu0 0.0
    %355 = vmatprep.subr.mxu0 0.0
    %356 = vmatpush1.msra.mxu0 0.0
    %357 = vmatprep.subr.mxu0 0.0
    %358 = vmatpush1.msra.mxu0 0.0
    %359 = vmatprep.subr.mxu0 0.0
    %360 = vmatpush1.msra.mxu0 0.0
    %361 = vmatprep.subr.mxu0 0.0
    %362 = vmatpush1.msra.mxu0 0.0
    %363 = vmatprep.subr.mxu0 0.0
    %364 = vmatpush1.msra.mxu0 0.0
    %365 = vmatprep.subr.mxu0 0.0
    %366 = vmatpush1.msra.mxu0 0.0
    %367 = vmatprep.subr.mxu0 0.0
    %368 = vmatpush1.msra.mxu0 0.0
    %369 = vmatprep.mubr.f32.mxu0 0.0
    %370 = vmatmul.mubr.f32.gmra.mrb[0].mxu0 %v303
    %v371 = vpop.f32.mrb[0].mxu0
    %v372 = vadd.f32 0.0, %v371
    %v373 = vpop.f32.mrb[0].mxu0
    %374 = vdwg.mxu0
    %v375 = vld [vmem:[%s6] sm:$0x3f]
    %377 = vset.pattern.permute.xlu0 0
    %378 = vperm.xlu0 %377, %v375
    %v379 = vpop.permute.xlu0 %378
    %v381 = vmul.f32 %v372, %v379
    %vm382 = vcmask 259072
    %383 = vst.msk [vmem:[#allocation2] sm:$0x3f] %vm382, %v381
    // Predicated region
    $region30: #{tpu_custom_call.1} parent=1 // pred_check
      _
    $region31: #{tpu_custom_call.1} parent=1 // pred_check_branch
      %385 = sbr.rel (0) target = $region33
    $region32: #{tpu_custom_call.1} parent=1 // pred_region
      _
    $region33: #{tpu_custom_call.1} parent=1 // pred_fallthru
      _
    // Predicated region
    $region34: #{tpu_custom_call.1} parent=1 // pred_check
      _
    $region35: #{tpu_custom_call.1} parent=1 // pred_check_branch
      %387 = sbr.rel (0) target = $region37
    $region36: #{tpu_custom_call.1} parent=1 // pred_region
      %s389 = ssub.s32 128, 128
      %390 = vsyncadd [#allocation3], %s389
      %s392 = sshll.u32 [#allocation2], 4
      %s393 = int_to_ptr.vmem [resolvable:$true] %s392
      %395 = dma.vmem_to_hbm [thread:$0]  %s393, 128, %s8, [#allocation3]
    $region37: #{tpu_custom_call.1} parent=1 // pred_fallthru
      _
    // Predicated region
    $region38: #{tpu_custom_call.1} parent=1 // pred_check
      _
    $region39: #{tpu_custom_call.1} parent=1 // pred_check_branch
      %397 = sbr.rel (0) target = $region41
    $region40: #{tpu_custom_call.1} parent=1 // pred_region
      _
    $region41: #{tpu_custom_call.1} parent=1 // pred_fallthru
      _
    // Predicated region
    $region42: #{tpu_custom_call.1} parent=1 // pred_check
      _
    $region43: #{tpu_custom_call.1} parent=1 // pred_check_branch
      %399 = sbr.rel (0) target = $region45
    $region44: #{tpu_custom_call.1} parent=1 // pred_region
      %400 = dma.done [#allocation3], 128
    $region45: #{tpu_custom_call.1} parent=1 // pred_fallthru
      _
    %401 = vsyncpa [#allocation3], 1

</llo_original>
